<compile_context>
chip_gen: v5e
topology: v5e:2x2
jax: 0.10.0
libtpu: 0.0.40
codegen_flags: <defaults>
</compile_context>

<pallas_src>
import jax
import jax.numpy as jnp
from jax.experimental import pallas as pl
from jax.experimental.pallas import tpu as pltpu

_LANE = 128


def attention_kernel(x_ref, w1_ref, b1_ref, w2_ref, b2_ref, o_ref):
    # x_ref : (NB, C, T)   w1_ref: (Ch, C)   b1_ref: (Ch, 1)
    # w2_ref: (C, Ch)      b2_ref: (C, 1)    o_ref : (NB, C, T)
    w1 = w1_ref[...]
    b1 = b1_ref[...]
    w2 = w2_ref[...]
    b2 = b2_ref[...]
    # NB is a small static block dim; unroll so every image is a plain 2-D
    # channel matmul (avoids batched-dot transpose/relayout inside the kernel).
    for i in range(x_ref.shape[0]):
        x = x_ref[i].astype(jnp.float32)                               # (C, T)
        h = jnp.dot(w1, x, preferred_element_type=jnp.float32) + b1    # (Ch, T)
        h = jnp.maximum(h, 0.0)                                        # ReLU
        a = jnp.dot(w2, h, preferred_element_type=jnp.float32) + b2    # (C, T)
        a = jax.nn.sigmoid(a)                                          # Sigmoid
        o_ref[i] = (x * a).astype(o_ref.dtype)                         # x * attn


def _vmem_budget_bytes():
    """~75% of physical VMEM; falls back to the smallest generation (v7x, 64 MiB)."""
    phys = 64 << 20
    try:
        info = pltpu.get_tpu_info()
        phys = int(getattr(info, "vmem_capacity_bytes", phys) or phys)
    except Exception:
        pass
    return (phys * 3) // 4


def _choose_tiling(N, C, HW, itemsize, budget, block_bytes=None):
    """Pick (nb, hw_tile): batch-fold factor and spatial (lane) tile.

    Targets ~2 MiB per streaming block (>=1 MiB blocks measure ~85% of the HBM
    roofline vs ~63% at ~256 KiB), capped so ~8 block-sized buffers (double-
    buffered in/out + f32 intermediates) fit the VMEM budget, and keeps >= ~4
    grid steps when the problem is large enough (v7x dual-TC + pipelining).
    """
    min_blk = _LANE * C * itemsize
    target = block_bytes if block_bytes is not None else (2 << 20)
    cap = max(min_blk, budget // 8)
    blk = max(min_blk, min(target, cap))

    bpl = C * itemsize  # bytes per spatial column (all channels)
    if HW * bpl <= blk:
        # Whole per-image spatial extent fits one block: fold batch images.
        hw_tile = HW
        nb = int(min(N, max(1, blk // (HW * bpl)), 8))
        min_steps = min(4, N)
        while nb > 1 and pl.cdiv(N, nb) < min_steps:
            nb -= 1
    else:
        nb = 1
        lanes = max(_LANE, ((blk // bpl) // _LANE) * _LANE)
        hw_tile = int(min(lanes, HW))
        while hw_tile > _LANE and N * pl.cdiv(HW, hw_tile) < 4:
            hw_tile = max(_LANE, ((hw_tile // 2) // _LANE) * _LANE)
    return nb, hw_tile


def attention_module(x_nchw, w1c, b1, w2c, b2, *, block_bytes=None):
    """x_nchw: (N, C, H, W).

    w1c: (C//8, C) = conv1.weight[:, :, 0, 0]   b1: (C//8,)
    w2c: (C, C//8) = conv2.weight[:, :, 0, 0]   b2: (C,)
    """
    N, C, H, W = x_nchw.shape
    Ch = w1c.shape[0]
    HW = H * W
    itemsize = jnp.dtype(x_nchw.dtype).itemsize

    # Free view (same memory layout as NCHW): spatial pixels on the lane axis.
    x_flat = x_nchw.reshape(N, C, HW)

    budget = _vmem_budget_bytes()
    nb, hw_tile = _choose_tiling(N, C, HW, itemsize, budget, block_bytes)
    grid = (pl.cdiv(N, nb), pl.cdiv(HW, hw_tile))

    w1c = w1c.astype(jnp.float32)
    w2c = w2c.astype(jnp.float32)
    b1_2d = b1.reshape(Ch, 1).astype(jnp.float32)
    b2_2d = b2.reshape(C, 1).astype(jnp.float32)

    # VMEM footprint: 2x double-buffered in + 2x out blocks (I/O dtype),
    # ~3 f32 intermediates (upcast x, attention map, product), weights, margin.
    blk_io = nb * C * hw_tile * itemsize
    blk_f32 = nb * C * hw_tile * 4
    w_bytes = 4 * int(w1c.size + w2c.size + b1.size + b2.size)
    vmem_needed = 4 * blk_io + 3 * blk_f32 + 2 * w_bytes + (4 << 20)
    vmem_limit = int(min(max(vmem_needed, 32 << 20), budget))

    # Memory-bound: tell XLA how cheap the flops are vs. the HBM traffic.
    m_pix = N * HW
    cost = pl.CostEstimate(
        flops=4 * m_pix * C * Ch + 4 * m_pix * C,
        transcendentals=m_pix * C,
        bytes_accessed=2 * m_pix * C * itemsize + w_bytes,
    )

    out_flat = pl.pallas_call(
        attention_kernel,
        out_shape=jax.ShapeDtypeStruct((N, C, HW), x_nchw.dtype),
        grid_spec=pltpu.PrefetchScalarGridSpec(
            num_scalar_prefetch=0,
            grid=grid,
            in_specs=[
                pl.BlockSpec((nb, C, hw_tile), lambda n, p: (n, 0, p)),  # x tile
                pl.BlockSpec((Ch, C), lambda n, p: (0, 0)),              # W1 (resident)
                pl.BlockSpec((Ch, 1), lambda n, p: (0, 0)),              # b1
                pl.BlockSpec((C, Ch), lambda n, p: (0, 0)),              # W2 (resident)
                pl.BlockSpec((C, 1), lambda n, p: (0, 0)),               # b2
            ],
            out_specs=pl.BlockSpec((nb, C, hw_tile), lambda n, p: (n, 0, p)),
        ),
        compiler_params=pltpu.CompilerParams(
            dimension_semantics=("parallel", "parallel"),
            vmem_limit_bytes=vmem_limit,
        ),
        cost_estimate=cost,
    )(x_flat, w1c, b1_2d, w2c, b2_2d)

    return out_flat.reshape(N, C, H, W)


def init_params(key, in_channels):
    """Deterministic init matching the PyTorch module's parameter shapes.

    Conv2d(C, C//8, 1).weight is (C//8, C, 1, 1); we keep the conv orientation
    directly: w1c = weight[:, :, 0, 0] of shape (C//8, C), w2c of shape (C, C//8).
    """
    C = in_channels
    Ch = C // 8
    k1, k2, k3, k4 = jax.random.split(key, 4)
    bound1 = 1.0 / jnp.sqrt(C)    # conv1 fan_in = C
    bound2 = 1.0 / jnp.sqrt(Ch)   # conv2 fan_in = C//8
    w1c = jax.random.uniform(k1, (Ch, C), jnp.float32, -bound1, bound1)
    b1 = jax.random.uniform(k2, (Ch,), jnp.float32, -bound1, bound1)
    w2c = jax.random.uniform(k3, (C, Ch), jnp.float32, -bound2, bound2)
    b2 = jax.random.uniform(k4, (C,), jnp.float32, -bound2, bound2)
    return w1c, b1, w2c, b2


def reference_jax(x_nchw, w1c, b1, w2c, b2):
    # Plain-JAX reference of the same math (NCHW, per-pixel channel matmuls).
    N, C, H, W = x_nchw.shape
    x = x_nchw.reshape(N, C, H * W).astype(jnp.float32)
    h = jnp.maximum(jnp.einsum("oc,ncp->nop", w1c, x) + b1[:, None], 0.0)
    a = jax.nn.sigmoid(jnp.einsum("co,nop->ncp", w2c, h) + b2[:, None])
    out = x * a
    return out.reshape(N, C, H, W).astype(x_nchw.dtype)


if __name__ == "__main__":
    key = jax.random.PRNGKey(0)
    kx, kp, kx2 = jax.random.split(key, 3)

    # Primary demo: small shape consistent with the module (in_channels=32 -> hidden=4).
    N, C, H, W = 2, 32, 16, 16
    x = jax.random.normal(kx, (N, C, H, W), jnp.float32)
    w1c, b1, w2c, b2 = init_params(kp, C)

    out = jax.block_until_ready(attention_module(x, w1c, b1, w2c, b2))
    ref = reference_jax(x, w1c, b1, w2c, b2)
    assert out.shape == (N, C, H, W)
    assert jnp.allclose(out, ref, atol=1e-5, rtol=1e-5), "mismatch vs reference"

    # Secondary check: spatial extent not 128-divisible + small forced blocks
    # -> exercises the cdiv grid with a masked partial last spatial block.
    x2 = jax.random.normal(kx2, (1, 32, 40, 40), jnp.float32)
    out2 = jax.block_until_ready(
        attention_module(x2, w1c, b1, w2c, b2, block_bytes=64 << 10))
    ref2 = reference_jax(x2, w1c, b1, w2c, b2)
    assert jnp.allclose(out2, ref2, atol=1e-5, rtol=1e-5), "mismatch (partial tile)"

    print("KERNEL_OK")
</pallas_src>

<mosaic_0001>
module attributes {stable_mosaic.version = 11 : i64} {
  func.func @attention_kernel(%arg0: i32, %arg1: i32, %arg2: memref<1x32x256xf32, #tpu.memory_space<vmem>>, %arg3: memref<4x32xf32, #tpu.memory_space<vmem>>, %arg4: memref<4x1xf32, #tpu.memory_space<vmem>>, %arg5: memref<32x4xf32, #tpu.memory_space<vmem>>, %arg6: memref<32x1xf32, #tpu.memory_space<vmem>>, %arg7: memref<1x32x256xf32, #tpu.memory_space<vmem>>) attributes {dimension_semantics = [#tpu.dimension_semantics<parallel>, #tpu.dimension_semantics<parallel>], iteration_bounds = array<i64: 2, 1>, scalar_prefetch = 0 : i64, scratch_operands = 0 : i64, tpu.core_type = #tpu.core_type<tc>, window_params = [{transform_indices = @transform_0, window_bounds = array<i64: 1, 32, 256>}, {pipeline_mode = #tpu.pipeline_mode<synchronous>, transform_indices = @transform_1, window_bounds = array<i64: 4, 32>}, {pipeline_mode = #tpu.pipeline_mode<synchronous>, transform_indices = @transform_2, window_bounds = array<i64: 4, 1>}, {pipeline_mode = #tpu.pipeline_mode<synchronous>, transform_indices = @transform_3, window_bounds = array<i64: 32, 4>}, {pipeline_mode = #tpu.pipeline_mode<synchronous>, transform_indices = @transform_4, window_bounds = array<i64: 32, 1>}, {transform_indices = @transform_5, window_bounds = array<i64: 1, 32, 256>}]} {
    %c0 = arith.constant 0 : index
    %c0_0 = arith.constant 0 : index
    %0 = vector.load %arg3[%c0, %c0_0] : memref<4x32xf32, #tpu.memory_space<vmem>>, vector<4x32xf32>
    %c0_1 = arith.constant 0 : index
    %c0_2 = arith.constant 0 : index
    %1 = vector.load %arg4[%c0_1, %c0_2] : memref<4x1xf32, #tpu.memory_space<vmem>>, vector<4x1xf32>
    %c0_3 = arith.constant 0 : index
    %c0_4 = arith.constant 0 : index
    %2 = vector.load %arg5[%c0_3, %c0_4] : memref<32x4xf32, #tpu.memory_space<vmem>>, vector<32x4xf32>
    %c0_5 = arith.constant 0 : index
    %c0_6 = arith.constant 0 : index
    %3 = vector.load %arg6[%c0_5, %c0_6] : memref<32x1xf32, #tpu.memory_space<vmem>>, vector<32x1xf32>
    %c0_7 = arith.constant 0 : index
    %c0_8 = arith.constant 0 : index
    %c0_9 = arith.constant 0 : index
    %4 = vector.load %arg2[%c0_7, %c0_8, %c0_9] : memref<1x32x256xf32, #tpu.memory_space<vmem>>, vector<1x32x256xf32>
    %5 = vector.shape_cast %4 : vector<1x32x256xf32> to vector<32x256xf32>
    %cst = arith.constant dense<0.000000e+00> : vector<4x256xf32>
    %6 = tpu.matmul %0, %5, %cst {dimension_numbers = #tpu.dot_dimension_numbers<[1], [0], [0], [1], [0, 0, 1, 1], [], []>} : vector<4x32xf32>, vector<32x256xf32>, vector<4x256xf32> -> vector<4x256xf32>
    %7 = vector.broadcast %1 : vector<4x1xf32> to vector<4x256xf32>
    %8 = arith.addf %6, %7 : vector<4x256xf32>
    %cst_10 = arith.constant 0.000000e+00 : f32
    %9 = vector.broadcast %cst_10 : f32 to vector<4x256xf32>
    %10 = arith.maximumf %8, %9 : vector<4x256xf32>
    %cst_11 = arith.constant dense<0.000000e+00> : vector<32x256xf32>
    %11 = tpu.matmul %2, %10, %cst_11 {dimension_numbers = #tpu.dot_dimension_numbers<[1], [0], [0], [1], [0, 0, 1, 1], [], []>} : vector<32x4xf32>, vector<4x256xf32>, vector<32x256xf32> -> vector<32x256xf32>
    %12 = vector.broadcast %3 : vector<32x1xf32> to vector<32x256xf32>
    %13 = arith.addf %11, %12 : vector<32x256xf32>
    %14 = arith.negf %13 : vector<32x256xf32>
    %15 = math.exp %14 : vector<32x256xf32>
    %cst_12 = arith.constant 1.000000e+00 : f32
    %16 = vector.broadcast %cst_12 : f32 to vector<32x256xf32>
    %17 = arith.addf %16, %15 : vector<32x256xf32>
    %18 = arith.divf %16, %17 : vector<32x256xf32>
    %19 = arith.mulf %5, %18 : vector<32x256xf32>
    %c0_13 = arith.constant 0 : index
    %c0_14 = arith.constant 0 : index
    %c0_15 = arith.constant 0 : index
    %20 = vector.load %arg7[%c0_13, %c0_14, %c0_15] : memref<1x32x256xf32, #tpu.memory_space<vmem>>, vector<1x32x256xf32>
    %21 = vector.shape_cast %20 : vector<1x32x256xf32> to vector<32x256xf32>
    %22 = vector.shape_cast %19 : vector<32x256xf32> to vector<1x32x256xf32>
    tpu.vector_store %arg7[%c0_13, %c0_14, %c0_15], %22 {strides = array<i32>} : memref<1x32x256xf32, #tpu.memory_space<vmem>>, vector<1x32x256xf32>,
    return
  }
  func.func @transform_0(%arg0: i32, %arg1: i32) -> (i32, i32, i32) {
    %c0_i32 = arith.constant 0 : i32
    %c0_i32_0 = arith.constant 0 : i32
    return %arg0, %c0_i32, %arg1 : i32, i32, i32
  }
  func.func @transform_1(%arg0: i32, %arg1: i32) -> (i32, i32) {
    %c0_i32 = arith.constant 0 : i32
    %c0_i32_0 = arith.constant 0 : i32
    %c0_i32_1 = arith.constant 0 : i32
    return %c0_i32, %c0_i32_0 : i32, i32
  }
  func.func @transform_2(%arg0: i32, %arg1: i32) -> (i32, i32) {
    %c0_i32 = arith.constant 0 : i32
    %c0_i32_0 = arith.constant 0 : i32
    %c0_i32_1 = arith.constant 0 : i32
    return %c0_i32, %c0_i32_0 : i32, i32
  }
  func.func @transform_3(%arg0: i32, %arg1: i32) -> (i32, i32) {
    %c0_i32 = arith.constant 0 : i32
    %c0_i32_0 = arith.constant 0 : i32
    %c0_i32_1 = arith.constant 0 : i32
    return %c0_i32, %c0_i32_0 : i32, i32
  }
  func.func @transform_4(%arg0: i32, %arg1: i32) -> (i32, i32) {
    %c0_i32 = arith.constant 0 : i32
    %c0_i32_0 = arith.constant 0 : i32
    %c0_i32_1 = arith.constant 0 : i32
    return %c0_i32, %c0_i32_0 : i32, i32
  }
  func.func @transform_5(%arg0: i32, %arg1: i32) -> (i32, i32, i32) {
    %c0_i32 = arith.constant 0 : i32
    %c0_i32_0 = arith.constant 0 : i32
    return %arg0, %c0_i32, %arg1 : i32, i32, i32
  }
}

</mosaic_0001>

<llo_original>
// kernel: tpu_custom_call.1
$region0: #{tpu_custom_call.1}
  #allocation0 [shape = 'u32[]', space=smem, size = 0x4, offset = 0x4, fixed_abs, tag = 'smem constant byte address 0x4 - core index']
  #allocation1 [shape = 'u32[72,128]{1,0:T(1,128)}', space=vmem, size = 0x9000, scoped, tag = 'internal scratch']
  %s0 = inlined_call_operand.hbm [shape: f32[2,32,256], index: 0, kind: input, shape index: {}]
  %s1 = inlined_call_operand.vmem [shape: f32[4,32], index: 1, kind: input, shape index: {}]
  %s2 = inlined_call_operand.vmem [shape: f32[4,1], index: 2, kind: input, shape index: {}]
  %s3 = inlined_call_operand.vmem [shape: f32[32,4], index: 3, kind: input, shape index: {}]
  %s4 = inlined_call_operand.vmem [shape: f32[32,1], index: 4, kind: input, shape index: {}]
  %s5 = inlined_call_operand.hbm [shape: f32[2,32,256], index: 5, kind: output, shape index: {}]
  %s6 = sld [smem:[#allocation0]]
  $region57: #{tpu_custom_call.1} parent=0
    _
  %s8 = ssub.s32 1, %s6
  %s9 = scalar_select 0, %s8, %s6
  $region1: #{tpu_custom_call.1} parent=0
    #allocation2 [shape = 'u8[65536]{0}', space=vmem, size = 0x10000, scoped, tag = 'input window, operand 0']
    #allocation3 [shape = 's32[2]{0}', space=sflag, size = 0x8, scoped, tag = 'scoped memory for tpu_custom_call.1']
    #allocation4 [shape = 's32[2]{0}', space=sflag, size = 0x8, scoped, tag = 'scoped memory for tpu_custom_call.1']
    #allocation5 [shape = 'u8[65536]{0}', space=vmem, size = 0x10000, scoped, tag = 'output window, operand 0']
    %10 = vsyncpa [#allocation3], 0
    %s11 = scalar_lea.sflag [#allocation3], 1
    %12 = vsyncpa %s11, 0
    %13 = vsyncpa [#allocation4], 0
    %s14 = scalar_lea.sflag [#allocation4], 1
    %15 = vsyncpa %s14, 0
    loop: start=0, step=1, limit=4
    $region2: #{tpu_custom_call.1} parent=1 // loop_pre_header
      _
    $region3: #{tpu_custom_call.1} parent=1 // loop_header
      %s17 = sphi 0, %s21
      %p18 = scmp.ge.s32.totalorder %s17, 4
      %s24 = sphi 0, %s36
      %s25 = sphi 0, %s32
      %s26 = sphi 0, %s24
      %s27 = sphi 0, %s25
      %s28 = sphi 0, %s26
      %s29 = sphi 0, %s27
      %s41 = sphi 0, %s43
      %s44 = sphi 0, %s41
      %s45 = sphi 0, %s44
      %s61 = sphi 0, %s45
      %s65 = sphi 0, %s65
      %s67 = sphi 0, %s65
      %s68 = sphi 0, %s67
      %s82 = sphi 0, %s68
      %s86 = sphi 0, %s86
      %s88 = sphi 0, %s86
      %s89 = sphi 0, %s88
      %s103 = sphi 0, %s89
      %s107 = sphi 0, %s107
      %s109 = sphi 0, %s107
      %s110 = sphi 0, %s109
      %s124 = sphi 0, %s110
      %s128 = sphi 0, %s128
      %s130 = sphi 0, %s128
      %s131 = sphi 0, %s130
      %s145 = sphi 0, %s131
      %s153 = sphi 0, %s155
      %s156 = sphi 0, %s153
      %s157 = sphi 0, %s156
      %s173 = sphi 0, %s157
    $region4: #{tpu_custom_call.1} parent=1 // loop_header_branch
      %20 = sbr.rel (%p18) target = $region8
    $region5: #{tpu_custom_call.1} parent=1 // loop_body
      %s22 = ssub.s32 %s17, 1
      %s23 = ssub.s32 %s17, 2
      %s30 = sadd.s32 1, %s25
      %p31 = scmp.ge.s32.totalorder %s30, 1
      %s32 = scalar_select %p31, 0, %s30
      %s33 = sadd.s32 1, %s24
      %s34 = scalar_select %p31, %s33, %s24
      %p35 = scmp.ge.s32.totalorder %s34, 2
      %s36 = scalar_select %p35, 0, %s34
      %s37 = ssub.s32 %s24, %s36
      %s38 = ssub.s32 %s25, %s32
      %s39 = sor.u32 %s37, %s38
      %p40 = scmp.eq.s32.totalorder %s39, 0
      %s42 = sadd.s32 %s41, 1
      %s43 = scalar_select %p40, %s41, %s42
      %p46 = pneg %p40
      %p47 = scmp.eq.s32.totalorder %s17, 1
      %p48 = por %p46, %p47
      %p49 = scmp.ne.s32.totalorder %s41, %s44
      %p50 = scmp.eq.s32.totalorder %s17, 0
      %p51 = por %p49, %p50
      %p52 = scmp.ne.s32.totalorder %s41, %s44
      %p53 = scmp.eq.s32.totalorder %s22, 1
      %p54 = por %p52, %p53
      %p55 = scmp.ne.s32.totalorder %s44, %s45
      %p56 = scmp.eq.s32.totalorder %s22, 0
      %p57 = por %p55, %p56
      %p58 = scmp.ne.s32.totalorder %s44, %s45
      %p59 = scmp.eq.s32.totalorder %s23, 1
      %p60 = por %p58, %p59
      %p62 = scmp.ne.s32.totalorder %s45, %s61
      %p63 = scmp.eq.s32.totalorder %s23, 0
      %p64 = por %p62, %p63
      %s66 = sadd.s32 %s65, 1
      %p69 = scmp.eq.s32.totalorder %s17, 1
      %p70 = scmp.ne.s32.totalorder %s65, %s67
      %p71 = scmp.eq.s32.totalorder %s17, 0
      %p72 = por %p70, %p71
      %p73 = scmp.ne.s32.totalorder %s65, %s67
      %p74 = scmp.eq.s32.totalorder %s22, 1
      %p75 = por %p73, %p74
      %p76 = scmp.ne.s32.totalorder %s67, %s68
      %p77 = scmp.eq.s32.totalorder %s22, 0
      %p78 = por %p76, %p77
      %p79 = scmp.ne.s32.totalorder %s67, %s68
      %p80 = scmp.eq.s32.totalorder %s23, 1
      %p81 = por %p79, %p80
      %p83 = scmp.ne.s32.totalorder %s68, %s82
      %p84 = scmp.eq.s32.totalorder %s23, 0
      %p85 = por %p83, %p84
      %s87 = sadd.s32 %s86, 1
      %p90 = scmp.eq.s32.totalorder %s17, 1
      %p91 = scmp.ne.s32.totalorder %s86, %s88
      %p92 = scmp.eq.s32.totalorder %s17, 0
      %p93 = por %p91, %p92
      %p94 = scmp.ne.s32.totalorder %s86, %s88
      %p95 = scmp.eq.s32.totalorder %s22, 1
      %p96 = por %p94, %p95
      %p97 = scmp.ne.s32.totalorder %s88, %s89
      %p98 = scmp.eq.s32.totalorder %s22, 0
      %p99 = por %p97, %p98
      %p100 = scmp.ne.s32.totalorder %s88, %s89
      %p101 = scmp.eq.s32.totalorder %s23, 1
      %p102 = por %p100, %p101
      %p104 = scmp.ne.s32.totalorder %s89, %s103
      %p105 = scmp.eq.s32.totalorder %s23, 0
      %p106 = por %p104, %p105
      %s108 = sadd.s32 %s107, 1
      %p111 = scmp.eq.s32.totalorder %s17, 1
      %p112 = scmp.ne.s32.totalorder %s107, %s109
      %p113 = scmp.eq.s32.totalorder %s17, 0
      %p114 = por %p112, %p113
      %p115 = scmp.ne.s32.totalorder %s107, %s109
      %p116 = scmp.eq.s32.totalorder %s22, 1
      %p117 = por %p115, %p116
      %p118 = scmp.ne.s32.totalorder %s109, %s110
      %p119 = scmp.eq.s32.totalorder %s22, 0
      %p120 = por %p118, %p119
      %p121 = scmp.ne.s32.totalorder %s109, %s110
      %p122 = scmp.eq.s32.totalorder %s23, 1
      %p123 = por %p121, %p122
      %p125 = scmp.ne.s32.totalorder %s110, %s124
      %p126 = scmp.eq.s32.totalorder %s23, 0
      %p127 = por %p125, %p126
      %s129 = sadd.s32 %s128, 1
      %p132 = scmp.eq.s32.totalorder %s17, 1
      %p133 = scmp.ne.s32.totalorder %s128, %s130
      %p134 = scmp.eq.s32.totalorder %s17, 0
      %p135 = por %p133, %p134
      %p136 = scmp.ne.s32.totalorder %s128, %s130
      %p137 = scmp.eq.s32.totalorder %s22, 1
      %p138 = por %p136, %p137
      %p139 = scmp.ne.s32.totalorder %s130, %s131
      %p140 = scmp.eq.s32.totalorder %s22, 0
      %p141 = por %p139, %p140
      %p142 = scmp.ne.s32.totalorder %s130, %s131
      %p143 = scmp.eq.s32.totalorder %s23, 1
      %p144 = por %p142, %p143
      %p146 = scmp.ne.s32.totalorder %s131, %s145
      %p147 = scmp.eq.s32.totalorder %s23, 0
      %p148 = por %p146, %p147
      %s149 = ssub.s32 %s24, %s36
      %s150 = ssub.s32 %s25, %s32
      %s151 = sor.u32 %s149, %s150
      %p152 = scmp.eq.s32.totalorder %s151, 0
      %s154 = sadd.s32 %s153, 1
      %s155 = scalar_select %p152, %s153, %s154
      %p158 = pneg %p152
      %p159 = scmp.eq.s32.totalorder %s17, 1
      %p160 = por %p158, %p159
      %p161 = scmp.ne.s32.totalorder %s153, %s156
      %p162 = scmp.eq.s32.totalorder %s17, 0
      %p163 = por %p161, %p162
      %p164 = scmp.ne.s32.totalorder %s153, %s156
      %p165 = scmp.eq.s32.totalorder %s22, 1
      %p166 = por %p164, %p165
      %p167 = scmp.ne.s32.totalorder %s156, %s157
      %p168 = scmp.eq.s32.totalorder %s22, 0
      %p169 = por %p167, %p168
      %p170 = scmp.ne.s32.totalorder %s156, %s157
      %p171 = scmp.eq.s32.totalorder %s23, 1
      %p172 = por %p170, %p171
      %p174 = scmp.ne.s32.totalorder %s157, %s173
      %p175 = scmp.eq.s32.totalorder %s23, 0
      %p176 = por %p174, %p175
      %p177 = scmp.le.s32.totalorder 1, %s17
      %p178 = scmp.lt.s32.totalorder %s17, 3
      %p179 = pnand %p177, %p178
      %p180 = pneg %p179
      // Predicated region
      $region9: #{tpu_custom_call.1} parent=5 // pred_check
        _
      $region10: #{tpu_custom_call.1} parent=5 // pred_check_branch
        %182 = sbr.rel (%p179) target = $region12
      $region11: #{tpu_custom_call.1} parent=5 // pred_region
        %s183 = ssub.s32 %s17, 1
        // Predicated region
        $region13: #{tpu_custom_call.1} parent=11 // pred_check
          %p184 = pneg %p78
        $region14: #{tpu_custom_call.1} parent=11 // pred_check_branch
          %186 = sbr.rel (%p184) target = $region16
        $region15: #{tpu_custom_call.1} parent=11 // pred_region
          _
        $region16: #{tpu_custom_call.1} parent=11 // pred_fallthru
          _
        // Predicated region
        $region17: #{tpu_custom_call.1} parent=11 // pred_check
          %p187 = pneg %p99
        $region18: #{tpu_custom_call.1} parent=11 // pred_check_branch
          %189 = sbr.rel (%p187) target = $region20
        $region19: #{tpu_custom_call.1} parent=11 // pred_region
          _
        $region20: #{tpu_custom_call.1} parent=11 // pred_fallthru
          _
        // Predicated region
        $region21: #{tpu_custom_call.1} parent=11 // pred_check
          %p190 = pneg %p120
        $region22: #{tpu_custom_call.1} parent=11 // pred_check_branch
          %192 = sbr.rel (%p190) target = $region24
        $region23: #{tpu_custom_call.1} parent=11 // pred_region
          _
        $region24: #{tpu_custom_call.1} parent=11 // pred_fallthru
          _
        // Predicated region
        $region25: #{tpu_custom_call.1} parent=11 // pred_check
          %p193 = pneg %p141
        $region26: #{tpu_custom_call.1} parent=11 // pred_check_branch
          %195 = sbr.rel (%p193) target = $region28
        $region27: #{tpu_custom_call.1} parent=11 // pred_region
          _
        $region28: #{tpu_custom_call.1} parent=11 // pred_fallthru
          _
      $region12: #{tpu_custom_call.1} parent=5 // pred_fallthru
        _
      %p196 = scmp.lt.s32.totalorder %s17, 2
      // Predicated region
      $region29: #{tpu_custom_call.1} parent=5 // pred_check
        %p197 = pneg %p196
      $region30: #{tpu_custom_call.1} parent=5 // pred_check_branch
        %199 = sbr.rel (%p197) target = $region32
      $region31: #{tpu_custom_call.1} parent=5 // pred_region
        // Predicated region
        $region33: #{tpu_custom_call.1} parent=31 // pred_check
          %p200 = pneg %p51
        $region34: #{tpu_custom_call.1} parent=31 // pred_check_branch
          %202 = sbr.rel (%p200) target = $region36
        $region35: #{tpu_custom_call.1} parent=31 // pred_region
          %s203 = sand.u32 %s41, 1
          %s204 = scalar_lea.sflag [#allocation3], %s203
          %s205 = sand.u32 %s41, 1
          %s206 = smul.addr %s205, 64
          %s207 = scalar_lea.vmem [#allocation2], %s206
          %s208 = smul.u32 2, %s25
          %210 = vsyncadd %s204, 0
          %s211 = smul.addr %s24, 8
          %s212 = sadd.s32 %s208, %s211
          %s213 = smul.addr %s212, 8
          %s214 = scalar_lea.hbm %s0, %s213
          %s215 = sshll.u32 %s214, 4
          %s216 = int_to_ptr.hbm [resolvable:$true] %s215
          %s217 = sshll.u32 %s207, 4
          %s218 = int_to_ptr.vmem [resolvable:$true] %s217
          %223 = dma.hbm_to_vmem [thread:$0]  %s216, 1024, %s218, %s204, 256, 256, 16
        $region36: #{tpu_custom_call.1} parent=31 // pred_fallthru
          _
      $region32: #{tpu_custom_call.1} parent=5 // pred_fallthru
        _
      %p224 = scmp.le.s32.totalorder 1, %s17
      %p225 = scmp.lt.s32.totalorder %s17, 3
      %p226 = pnand %p224, %p225
      %p227 = pneg %p226
      // Predicated region
      $region37: #{tpu_custom_call.1} parent=5 // pred_check
        _
      $region38: #{tpu_custom_call.1} parent=5 // pred_check_branch
        %229 = sbr.rel (%p226) target = $region40
      $region39: #{tpu_custom_call.1} parent=5 // pred_region
        %s230 = ssub.s32 %s17, 1
        %s231 = sand.u32 %s44, 1
        %s232 = scalar_lea.sflag [#allocation3], %s231
        %s233 = sand.u32 %s44, 1
        %s234 = smul.addr %s233, 64
        %s235 = scalar_lea.vmem [#allocation2], %s234
        // Predicated region
        $region41: #{tpu_custom_call.1} parent=39 // pred_check
          %p236 = pneg %p57
        $region42: #{tpu_custom_call.1} parent=39 // pred_check_branch
          %238 = sbr.rel (%p236) target = $region44
        $region43: #{tpu_custom_call.1} parent=39 // pred_region
          %240 = dma.done %s232, 1024
        $region44: #{tpu_custom_call.1} parent=39 // pred_fallthru
          _
        %s241 = sand.u32 %s44, 1
        %s242 = scalar_lea.sflag [#allocation3], %s241
        %s243 = sand.u32 %s44, 1
        %s244 = smul.addr %s243, 64
        %s245 = scalar_lea.vmem [#allocation2], %s244
        %p246 = pneg %p57
        %p247 = pneg %p54
        %p248 = pneg %p78
        %p249 = pneg %p75
        %p250 = pneg %p99
        %p251 = pneg %p96
        %p252 = pneg %p120
        %p253 = pneg %p117
        %p254 = pneg %p141
        %p255 = pneg %p138
        %p256 = pneg %p169
        %p257 = pneg %p166
        %s258 = sand.u32 %s156, 1
        %s259 = scalar_lea.sflag [#allocation4], %s258
        %s260 = sand.u32 %s156, 1
        %s261 = smul.addr %s260, 64
        %s262 = scalar_lea.vmem [#allocation5], %s261
        %s263 = smul.u32 2, %s27
        %s264 = smul.u32 2, %s27
        %v265 = vld [vmem:[%s1] sm:$0xf]
        %v266 = vld [vmem:[%s2] sm:$0xf]
        %v267 = vld [vmem:[%s3] sm:$0xff]
        %v268 = vld [vmem:[%s3 + $0x8] sm:$0xff]
        %v269 = vld [vmem:[%s3 + $0x10] sm:$0xff]
        %v270 = vld [vmem:[%s3 + $0x18] sm:$0xff]
        %v271 = vld [vmem:[%s4] sm:$0xff]
        %v272 = vld [vmem:[%s4 + $0x8] sm:$0xff]
        %v273 = vld [vmem:[%s4 + $0x10] sm:$0xff]
        %v274 = vld [vmem:[%s4 + $0x18] sm:$0xff]
        %v275 = vld [vmem:[%s235] sm:$0xff]
        %v276 = vld [vmem:[%s235 + $0x8] sm:$0xff]
        %v277 = vld [vmem:[%s235 + $0x10] sm:$0xff]
        %v278 = vld [vmem:[%s235 + $0x18] sm:$0xff]
        %v279 = vld [vmem:[%s235 + $0x20] sm:$0xff]
        %v280 = vld [vmem:[%s235 + $0x28] sm:$0xff]
        %v281 = vld [vmem:[%s235 + $0x30] sm:$0xff]
        %v282 = vld [vmem:[%s235 + $0x38] sm:$0xff]
        %284 = vset.pattern.permute.xlu0 0
        %285 = vperm.xlu0 %284, %v266
        %v286 = vpop.permute.xlu0 %285
        %vm288 = vcmask 261120
        %v290 = vsel %vm288, %v265, 0
        %292 = vmatpush.msra.mxu0 0.0
        %293 = vmatpush.msra.mxu0 0.0
        %294 = vmatpush.msra.mxu0 0.0
        %295 = vmatpush.msra.mxu0 0.0
        %296 = vmatpush.msra.mxu0 0.0
        %297 = vmatpush.msra.mxu0 0.0
        %298 = vmatpush.msra.mxu0 0.0
        %299 = vmatpush.msra.mxu0 0.0
        %300 = vmatpush.msra.mxu0 0.0
        %301 = vmatpush.msra.mxu0 0.0
        %302 = vmatpush.msra.mxu0 0.0
        %303 = vmatpush.msra.mxu0 0.0
        %304 = vmatpush.msra.mxu0 %v281
        %305 = vmatpush.msra.mxu0 %v279
        %306 = vmatpush.msra.mxu0 %v277
        %307 = vmatpush.msra.mxu0 %v275
        %308 = vmatmul.f32.gmra.mxu0 %v290
        %v309 = vpop.f32.mrf.mxu0
        %v310 = vadd.f32 %v286, %v309
        %311 = vdwg.mxu0
        %312 = vmatpush.msra.mxu0 0.0
        %313 = vmatpush.msra.mxu0 0.0
        %314 = vmatpush.msra.mxu0 0.0
        %315 = vmatpush.msra.mxu0 0.0
        %316 = vmatpush.msra.mxu0 0.0
        %317 = vmatpush.msra.mxu0 0.0
        %318 = vmatpush.msra.mxu0 0.0
        %319 = vmatpush.msra.mxu0 0.0
        %320 = vmatpush.msra.mxu0 0.0
        %321 = vmatpush.msra.mxu0 0.0
        %322 = vmatpush.msra.mxu0 0.0
        %323 = vmatpush.msra.mxu0 0.0
        %324 = vmatpush.msra.mxu0 %v282
        %325 = vmatpush.msra.mxu0 %v280
        %326 = vmatpush.msra.mxu0 %v278
        %327 = vmatpush.msra.mxu0 %v276
        %328 = vmatmul.f32.gmra.mxu0 %v290
        %v329 = vpop.f32.mrf.mxu0
        %v330 = vadd.f32 %v286, %v329
        %331 = vdwg.mxu0
        %v332 = vmax.f32 %v310, 0.0
        %v333 = vmax.f32 %v330, 0.0
        %335 = vset.pattern.permute.xlu0 0
        %336 = vperm.xlu0 %335, %v271
        %v337 = vpop.permute.xlu0 %336
        %340 = vset.pattern.permute.xlu0 0
        %341 = vperm.xlu0 %340, %v272
        %v342 = vpop.permute.xlu0 %341
        %345 = vset.pattern.permute.xlu0 0
        %346 = vperm.xlu0 %345, %v273
        %v347 = vpop.permute.xlu0 %346
        %350 = vset.pattern.permute.xlu0 0
        %351 = vperm.xlu0 %350, %v274
        %v352 = vpop.permute.xlu0 %351
        %vm354 = vcmask 31744
        %v356 = vsel %vm354, %v267, 0
        %v359 = vsel %vm354, %v268, 0
        %v362 = vsel %vm354, %v269, 0
        %v365 = vsel %vm354, %v270, 0
        %vm367 = vcmask 1043456
        %v369 = vsel %vm367, %v332, 0
        %v372 = vsel %vm367, %v333, 0
        %374 = vmatpush.msra.mxu0 0.0
        %375 = vmatpush.msra.mxu0 0.0
        %376 = vmatpush.msra.mxu0 0.0
        %377 = vmatpush.msra.mxu0 0.0
        %378 = vmatpush.msra.mxu0 0.0
        %379 = vmatpush.msra.mxu0 0.0
        %380 = vmatpush.msra.mxu0 0.0
        %381 = vmatpush.msra.mxu0 0.0
        %382 = vmatpush.msra.mxu0 0.0
        %383 = vmatpush.msra.mxu0 0.0
        %384 = vmatpush.msra.mxu0 0.0
        %385 = vmatpush.msra.mxu0 0.0
        %386 = vmatpush.msra.mxu0 0.0
        %387 = vmatpush.msra.mxu0 0.0
        %388 = vmatpush.msra.mxu0 0.0
        %389 = vmatpush.msra.mxu0 %v369
        %390 = vmatmul.f32.gmra.mxu0 %v356
        %v391 = vpop.f32.mrf.mxu0
        %v392 = vadd.f32 %v337, %v391
        %393 = vmatmul.f32.gmra.mxu0 %v359
        %v394 = vpop.f32.mrf.mxu0
        %v395 = vadd.f32 %v342, %v394
        %396 = vmatmul.f32.gmra.mxu0 %v362
        %v397 = vpop.f32.mrf.mxu0
        %v398 = vadd.f32 %v347, %v397
        %399 = vmatmul.f32.gmra.mxu0 %v365
        %v400 = vpop.f32.mrf.mxu0
        %v401 = vadd.f32 %v352, %v400
        %402 = vdwg.mxu0
        %403 = vmatpush.msra.mxu0 0.0
        %404 = vmatpush.msra.mxu0 0.0
        %405 = vmatpush.msra.mxu0 0.0
        %406 = vmatpush.msra.mxu0 0.0
        %407 = vmatpush.msra.mxu0 0.0
        %408 = vmatpush.msra.mxu0 0.0
        %409 = vmatpush.msra.mxu0 0.0
        %410 = vmatpush.msra.mxu0 0.0
        %411 = vmatpush.msra.mxu0 0.0
        %412 = vmatpush.msra.mxu0 0.0
        %413 = vmatpush.msra.mxu0 0.0
        %414 = vmatpush.msra.mxu0 0.0
        %415 = vmatpush.msra.mxu0 0.0
        %416 = vmatpush.msra.mxu0 0.0
        %417 = vmatpush.msra.mxu0 0.0
        %418 = vmatpush.msra.mxu0 %v372
        %419 = vmatmul.f32.gmra.mxu0 %v356
        %v420 = vpop.f32.mrf.mxu0
        %v421 = vadd.f32 %v337, %v420
        %422 = vmatmul.f32.gmra.mxu0 %v359
        %v423 = vpop.f32.mrf.mxu0
        %v424 = vadd.f32 %v342, %v423
        %425 = vmatmul.f32.gmra.mxu0 %v362
        %v426 = vpop.f32.mrf.mxu0
        %v427 = vadd.f32 %v347, %v426
        %428 = vmatmul.f32.gmra.mxu0 %v365
        %v429 = vpop.f32.mrf.mxu0
        %v430 = vadd.f32 %v352, %v429
        %431 = vdwg.mxu0
        %v432 = vxor.u32 %v392, 2147483648
        %v433 = vxor.u32 %v421, 2147483648
        %v434 = vxor.u32 %v395, 2147483648
        %v435 = vxor.u32 %v424, 2147483648
        %v436 = vxor.u32 %v398, 2147483648
        %v437 = vxor.u32 %v427, 2147483648
        %v438 = vxor.u32 %v401, 2147483648
        %v439 = vxor.u32 %v430, 2147483648
        %v440 = vmul.f32 %v432, 1.442695
        %v441 = vpow.pop %v440
        %v442 = vmul.f32 %v433, 1.442695
        %v443 = vpow.pop %v442
        %v444 = vmul.f32 %v434, 1.442695
        %v445 = vpow.pop %v444
        %v446 = vmul.f32 %v435, 1.442695
        %v447 = vpow.pop %v446
        %v448 = vmul.f32 %v436, 1.442695
        %v449 = vpow.pop %v448
        %v450 = vmul.f32 %v437, 1.442695
        %v451 = vpow.pop %v450
        %v452 = vmul.f32 %v438, 1.442695
        %v453 = vpow.pop %v452
        %v454 = vmul.f32 %v439, 1.442695
        %v455 = vpow.pop %v454
        %v456 = vadd.f32 %v441, 1.0
        %v457 = vadd.f32 %v443, 1.0
        %v458 = vadd.f32 %v445, 1.0
        %v459 = vadd.f32 %v447, 1.0
        %v460 = vadd.f32 %v449, 1.0
        %v461 = vadd.f32 %v451, 1.0
        %v462 = vadd.f32 %v453, 1.0
        %v463 = vadd.f32 %v455, 1.0
        %v464 = vrcp.pop %v456
        %v465 = vmul.f32 %v456, %v464
        %v466 = vsub.f32 1.0, %v465
        %v467 = vmul.f32 %v464, %v466
        %v468 = vadd.f32 %v464, %v467
        %vm469 = vweird.f32 %v456
        %vm470 = vweird.f32 %v464
        %vm471 = vmor %vm469, %vm470
        %v472 = vsel %vm471, %v464, %v468
        %v473 = vand.u32 2147483647, %v456
        %vm474 = vcmp.eq.f32.partialorder %v473, 8.507059e+37
        %v475 = vand.u32 %v456, 2147483648
        %v476 = vor.u32 1.1754944e-38, %v475
        %v477 = vsel %vm474, %v476, %v472
        %v478 = vmul.f32 1.0, %v477
        %v479 = vrcp.pop %v457
        %v480 = vmul.f32 %v457, %v479
        %v481 = vsub.f32 1.0, %v480
        %v482 = vmul.f32 %v479, %v481
        %v483 = vadd.f32 %v479, %v482
        %vm484 = vweird.f32 %v457
        %vm485 = vweird.f32 %v479
        %vm486 = vmor %vm484, %vm485
        %v487 = vsel %vm486, %v479, %v483
        %v488 = vand.u32 2147483647, %v457
        %vm489 = vcmp.eq.f32.partialorder %v488, 8.507059e+37
        %v490 = vand.u32 %v457, 2147483648
        %v491 = vor.u32 1.1754944e-38, %v490
        %v492 = vsel %vm489, %v491, %v487
        %v493 = vmul.f32 1.0, %v492
        %v494 = vrcp.pop %v458
        %v495 = vmul.f32 %v458, %v494
        %v496 = vsub.f32 1.0, %v495
        %v497 = vmul.f32 %v494, %v496
        %v498 = vadd.f32 %v494, %v497
        %vm499 = vweird.f32 %v458
        %vm500 = vweird.f32 %v494
        %vm501 = vmor %vm499, %vm500
        %v502 = vsel %vm501, %v494, %v498
        %v503 = vand.u32 2147483647, %v458
        %vm504 = vcmp.eq.f32.partialorder %v503, 8.507059e+37
        %v505 = vand.u32 %v458, 2147483648
        %v506 = vor.u32 1.1754944e-38, %v505
        %v507 = vsel %vm504, %v506, %v502
        %v508 = vmul.f32 1.0, %v507
        %v509 = vrcp.pop %v459
        %v510 = vmul.f32 %v459, %v509
        %v511 = vsub.f32 1.0, %v510
        %v512 = vmul.f32 %v509, %v511
        %v513 = vadd.f32 %v509, %v512
        %vm514 = vweird.f32 %v459
        %vm515 = vweird.f32 %v509
        %vm516 = vmor %vm514, %vm515
        %v517 = vsel %vm516, %v509, %v513
        %v518 = vand.u32 2147483647, %v459
        %vm519 = vcmp.eq.f32.partialorder %v518, 8.507059e+37
        %v520 = vand.u32 %v459, 2147483648
        %v521 = vor.u32 1.1754944e-38, %v520
        %v522 = vsel %vm519, %v521, %v517
        %v523 = vmul.f32 1.0, %v522
        %v524 = vrcp.pop %v460
        %v525 = vmul.f32 %v460, %v524
        %v526 = vsub.f32 1.0, %v525
        %v527 = vmul.f32 %v524, %v526
        %v528 = vadd.f32 %v524, %v527
        %vm529 = vweird.f32 %v460
        %vm530 = vweird.f32 %v524
        %vm531 = vmor %vm529, %vm530
        %v532 = vsel %vm531, %v524, %v528
        %v533 = vand.u32 2147483647, %v460
        %vm534 = vcmp.eq.f32.partialorder %v533, 8.507059e+37
        %v535 = vand.u32 %v460, 2147483648
        %v536 = vor.u32 1.1754944e-38, %v535
        %v537 = vsel %vm534, %v536, %v532
        %v538 = vmul.f32 1.0, %v537
        %v539 = vrcp.pop %v461
        %v540 = vmul.f32 %v461, %v539
        %v541 = vsub.f32 1.0, %v540
        %v542 = vmul.f32 %v539, %v541
        %v543 = vadd.f32 %v539, %v542
        %vm544 = vweird.f32 %v461
        %vm545 = vweird.f32 %v539
        %vm546 = vmor %vm544, %vm545
        %v547 = vsel %vm546, %v539, %v543
        %v548 = vand.u32 2147483647, %v461
        %vm549 = vcmp.eq.f32.partialorder %v548, 8.507059e+37
        %v550 = vand.u32 %v461, 2147483648
        %v551 = vor.u32 1.1754944e-38, %v550
        %v552 = vsel %vm549, %v551, %v547
        %v553 = vmul.f32 1.0, %v552
        %v554 = vrcp.pop %v462
        %v555 = vmul.f32 %v462, %v554
        %v556 = vsub.f32 1.0, %v555
        %v557 = vmul.f32 %v554, %v556
        %v558 = vadd.f32 %v554, %v557
        %vm559 = vweird.f32 %v462
        %vm560 = vweird.f32 %v554
        %vm561 = vmor %vm559, %vm560
        %v562 = vsel %vm561, %v554, %v558
        %v563 = vand.u32 2147483647, %v462
        %vm564 = vcmp.eq.f32.partialorder %v563, 8.507059e+37
        %v565 = vand.u32 %v462, 2147483648
        %v566 = vor.u32 1.1754944e-38, %v565
        %v567 = vsel %vm564, %v566, %v562
        %v568 = vmul.f32 1.0, %v567
        %v569 = vrcp.pop %v463
        %v570 = vmul.f32 %v463, %v569
        %v571 = vsub.f32 1.0, %v570
        %v572 = vmul.f32 %v569, %v571
        %v573 = vadd.f32 %v569, %v572
        %vm574 = vweird.f32 %v463
        %vm575 = vweird.f32 %v569
        %vm576 = vmor %vm574, %vm575
        %v577 = vsel %vm576, %v569, %v573
        %v578 = vand.u32 2147483647, %v463
        %vm579 = vcmp.eq.f32.partialorder %v578, 8.507059e+37
        %v580 = vand.u32 %v463, 2147483648
        %v581 = vor.u32 1.1754944e-38, %v580
        %v582 = vsel %vm579, %v581, %v577
        %v583 = vmul.f32 1.0, %v582
        %v584 = vmul.f32 %v275, %v478
        %v585 = vmul.f32 %v276, %v493
        %v586 = vmul.f32 %v277, %v508
        %v587 = vmul.f32 %v278, %v523
        %v588 = vmul.f32 %v279, %v538
        %v589 = vmul.f32 %v280, %v553
        %v590 = vmul.f32 %v281, %v568
        %v591 = vmul.f32 %v282, %v583
        %592 = vst [vmem:[%s262] sm:$0xff] %v584
        %593 = vst [vmem:[%s262 + $0x8] sm:$0xff] %v585
        %594 = vst [vmem:[%s262 + $0x10] sm:$0xff] %v586
        %595 = vst [vmem:[%s262 + $0x18] sm:$0xff] %v587
        %596 = vst [vmem:[%s262 + $0x20] sm:$0xff] %v588
        %597 = vst [vmem:[%s262 + $0x28] sm:$0xff] %v589
        %598 = vst [vmem:[%s262 + $0x30] sm:$0xff] %v590
        %599 = vst [vmem:[%s262 + $0x38] sm:$0xff] %v591
        %s600 = sand.u32 %s156, 1
        %s601 = scalar_lea.sflag [#allocation4], %s600
        %s602 = sand.u32 %s156, 1
        %s603 = smul.addr %s602, 64
        %s604 = scalar_lea.vmem [#allocation5], %s603
        // Predicated region
        $region45: #{tpu_custom_call.1} parent=39 // pred_check
          %p605 = pneg %p166
        $region46: #{tpu_custom_call.1} parent=39 // pred_check_branch
          %607 = sbr.rel (%p605) target = $region48
        $region47: #{tpu_custom_call.1} parent=39 // pred_region
          %s608 = smul.u32 2, %s27
          %610 = vsyncadd %s601, 0
          %s611 = smul.addr %s26, 8
          %s612 = sadd.s32 %s608, %s611
          %s613 = smul.addr %s612, 8
          %s614 = scalar_lea.hbm %s5, %s613
          %s615 = sshll.u32 %s604, 4
          %s616 = int_to_ptr.vmem [resolvable:$true] %s615
          %s617 = sshll.u32 %s614, 4
          %s618 = int_to_ptr.hbm [resolvable:$true] %s617
          %623 = dma.vmem_to_hbm [thread:$0]  %s616, 1024, %s618, %s601, 256, 256, 16
        $region48: #{tpu_custom_call.1} parent=39 // pred_fallthru
          _
      $region40: #{tpu_custom_call.1} parent=5 // pred_fallthru
        _
      %p624 = scmp.le.s32.totalorder 2, %s17
      // Predicated region
      $region49: #{tpu_custom_call.1} parent=5 // pred_check
        %p625 = pneg %p624
      $region50: #{tpu_custom_call.1} parent=5 // pred_check_branch
        %627 = sbr.rel (%p625) target = $region52
      $region51: #{tpu_custom_call.1} parent=5 // pred_region
        %s628 = ssub.s32 %s17, 2
        // Predicated region
        $region53: #{tpu_custom_call.1} parent=51 // pred_check
          %p629 = pneg %p172
        $region54: #{tpu_custom_call.1} parent=51 // pred_check_branch
          %631 = sbr.rel (%p629) target = $region56
        $region55: #{tpu_custom_call.1} parent=51 // pred_region
          %s632 = sand.u32 %s157, 1
          %s633 = scalar_lea.sflag [#allocation4], %s632
          %s634 = sand.u32 %s157, 1
          %s635 = smul.addr %s634, 64
          %s636 = scalar_lea.vmem [#allocation5], %s635
          %638 = dma.done %s633, 1024
        $region56: #{tpu_custom_call.1} parent=51 // pred_fallthru
          _
      $region52: #{tpu_custom_call.1} parent=5 // pred_fallthru
        _
    $region6: #{tpu_custom_call.1} parent=1 // loop_footer
      %s21 = sadd.s32 1, %s17
    $region7: #{tpu_custom_call.1} parent=1 // loop_footer_branch
      %16 = sbr.rel target = $region3
    $region8: #{tpu_custom_call.1} parent=1 // loop_exit
      _
    %639 = vsyncpa [#allocation3], 1
    %s640 = scalar_lea.sflag [#allocation3], 1
    %641 = vsyncpa %s640, 1
    %642 = vsyncpa [#allocation4], 1
    %s643 = scalar_lea.sflag [#allocation4], 1
    %644 = vsyncpa %s643, 1

</llo_original>
